<compile_context>
chip_gen: v7x
topology: tpu7x:2x2x1
jax: 0.10.0
libtpu: 0.0.40
codegen_flags: <defaults>
</compile_context>

<pallas_src>
import jax
import jax.numpy as jnp
from jax.experimental import pallas as pl
from jax.experimental.pallas import tpu as pltpu  # noqa: F401  (not needed for this tiny single-block kernel)


def _critic2_fused_kernel(x_ref, u_ref, t_ref,
                          w1x_ref, w1u_ref, w1t_ref, b1_ref,
                          w2_ref, b2_ref, w3_ref, b3_ref,
                          q_ref):
    """Fused twin-head MLP.

    Head packing (done once on the host in pack_critic2_params):
      layer 1: [in_dim, 2H]   (W1a || W1b along out-features), rows split by
               input (x / u / t) so no activation concat is needed.
      layer 2: [2H, 2H]       block-diagonal (heads stay independent)
      layer 3: [2H, 2]        block layout -> column 0 = q1, column 1 = q2
    Weights/activations are bf16 MXU operands; accumulation, bias adds and
    ReLUs are f32.
    """
    f32 = jnp.float32

    # ---- Layer 1: cat([x, u, t]) @ W1 without materializing the concat ----
    h = jnp.dot(x_ref[...], w1x_ref[...], preferred_element_type=f32)
    h = h + jnp.dot(u_ref[...], w1u_ref[...], preferred_element_type=f32)
    # t has a single feature: rank-1 contribution as a VPU broadcast multiply.
    h = h + t_ref[...].astype(f32) * w1t_ref[...].astype(f32)
    h = jnp.maximum(h + b1_ref[...], 0.0)

    # ---- Layer 2: block-diagonal, both heads in one MXU pass ----
    h = jnp.dot(h.astype(w2_ref.dtype), w2_ref[...], preferred_element_type=f32)
    h = jnp.maximum(h + b2_ref[...], 0.0)

    # ---- Layer 3: [B, 2H] @ [2H, 2] -> (q1, q2) in one (B, 2) store ----
    q = jnp.dot(h.astype(w3_ref.dtype), w3_ref[...], preferred_element_type=f32)
    q_ref[...] = (q + b3_ref[...]).astype(q_ref.dtype)


def pack_critic2_params(params, x_dim, u_dim, t_dim, compute_dtype=jnp.bfloat16):
    """Pack the two heads' (num_hiddens=1) layers into one fused weight stack."""
    assert t_dim == 1, "kernel handles the t term as a rank-1 broadcast (t_dim == 1)"
    (w1a, b1a), (w2a, b2a), (w3a, b3a) = params["q1"]
    (w1b, b1b), (w2b, b2b), (w3b, b3b) = params["q2"]
    in_dim, hidden = w1a.shape
    assert in_dim == x_dim + u_dim + t_dim

    w1 = jnp.concatenate([w1a, w1b], axis=1)                     # [in_dim, 2H]
    zeros_hh = jnp.zeros((hidden, hidden), jnp.float32)
    zeros_h1 = jnp.zeros((hidden, 1), jnp.float32)
    return {
        "w1x": w1[:x_dim].astype(compute_dtype),                 # [x_dim, 2H]
        "w1u": w1[x_dim:x_dim + u_dim].astype(compute_dtype),    # [u_dim, 2H]
        "w1t": w1[x_dim + u_dim:].astype(compute_dtype),         # [1, 2H]
        "b1": jnp.concatenate([b1a, b1b], axis=1).astype(jnp.float32),   # [1, 2H]
        "w2": jnp.block([[w2a, zeros_hh],
                         [zeros_hh, w2b]]).astype(compute_dtype),        # [2H, 2H]
        "b2": jnp.concatenate([b2a, b2b], axis=1).astype(jnp.float32),   # [1, 2H]
        "w3": jnp.block([[w3a, zeros_h1],
                         [zeros_h1, w3b]]).astype(compute_dtype),        # [2H, 2]
        "b3": jnp.concatenate([b3a, b3b], axis=1).astype(jnp.float32),   # [1, 2]
    }


@jax.jit
def critic2_forward(x, u, t, packed):
    """x: [B, x_dim], u: [B, u_dim], t: [B, 1]; packed: pack_critic2_params output."""
    B = x.shape[0]
    cdt = packed["w1x"].dtype
    args = (x.astype(cdt), u.astype(cdt), t.astype(cdt),
            packed["w1x"], packed["w1u"], packed["w1t"], packed["b1"],
            packed["w2"], packed["b2"], packed["w3"], packed["b3"])

    def full_spec(a):
        # Single grid point: each operand is one full-array VMEM block.
        return pl.BlockSpec(a.shape, lambda: (0,) * a.ndim)

    q = pl.pallas_call(
        _critic2_fused_kernel,
        grid=(),
        in_specs=[full_spec(a) for a in args],
        out_specs=pl.BlockSpec((B, 2), lambda: (0, 0)),
        out_shape=jax.ShapeDtypeStruct((B, 2), jnp.float32),
    )(*args)
    return q[:, 0:1], q[:, 1:2]


def _init_linear(key, fan_in, fan_out):
    """Deterministic init mimicking PyTorch nn.Linear default (U[-1/sqrt(fan_in), +])."""
    kw, kb = jax.random.split(key)
    bound = 1.0 / jnp.sqrt(float(fan_in))
    w = jax.random.uniform(kw, (fan_in, fan_out), jnp.float32, -bound, bound)
    b = jax.random.uniform(kb, (1, fan_out), jnp.float32, -bound, bound)
    return w, b


def init_critic2_params(key, in_dim, hidden_dim, num_hiddens=1):
    keys = jax.random.split(key, 2 * (num_hiddens + 2))
    k_iter = iter(keys)
    params = {}
    for head in ("q1", "q2"):
        layers = [_init_linear(next(k_iter), in_dim, hidden_dim)]
        for _ in range(num_hiddens):
            layers.append(_init_linear(next(k_iter), hidden_dim, hidden_dim))
        layers.append(_init_linear(next(k_iter), hidden_dim, 1))
        params[head] = layers
    return params


def _reference_forward_f32(x, u, t, params):
    """Plain-JAX f32 reference of the original module's forward."""
    xu = jnp.concatenate([x, u, t], axis=1)

    def head(layers):
        h = xu
        for (w, b) in layers[:-1]:
            h = jnp.maximum(h @ w + b, 0.0)
        w, b = layers[-1]
        return h @ w + b

    return head(params["q1"]), head(params["q2"])


def _reference_forward_bf16(x, u, t, params):
    """Plain-JAX reference with the kernel's numerics: bf16 operands, f32 accumulation."""
    cdt = jnp.bfloat16
    xu = jnp.concatenate([x, u, t], axis=1).astype(cdt)

    def head(layers):
        h = xu
        for (w, b) in layers[:-1]:
            h = jnp.dot(h, w.astype(cdt), preferred_element_type=jnp.float32) + b
            h = jnp.maximum(h, 0.0).astype(cdt)
        w, b = layers[-1]
        return jnp.dot(h, w.astype(cdt), preferred_element_type=jnp.float32) + b

    return head(params["q1"]), head(params["q2"])


if __name__ == "__main__":
    # Small shapes implied by the forward:
    #   x: [batch, state_features], u: [batch, action_dim], t: [batch, 1]
    batch, x_dim, u_dim, t_dim, hidden = 8, 11, 4, 1, 32
    in_dim = x_dim + u_dim + t_dim  # 16

    key = jax.random.PRNGKey(0)
    kx, ku, kt, kp = jax.random.split(key, 4)
    x = jax.random.normal(kx, (batch, x_dim), jnp.float32)
    u = jax.random.normal(ku, (batch, u_dim), jnp.float32)
    t = jax.random.normal(kt, (batch, t_dim), jnp.float32)

    params = init_critic2_params(kp, in_dim, hidden, num_hiddens=1)
    packed = pack_critic2_params(params, x_dim, u_dim, t_dim)

    q1, q2 = critic2_forward(x, u, t, packed)
    jax.block_until_ready((q1, q2))
    assert q1.shape == (batch, 1) and q2.shape == (batch, 1)

    # Tight check vs a reference using the same bf16-operand / f32-accum numerics.
    e1, e2 = _reference_forward_bf16(x, u, t, params)
    assert jnp.allclose(q1, e1, atol=1e-3, rtol=1e-3), float(jnp.max(jnp.abs(q1 - e1)))
    assert jnp.allclose(q2, e2, atol=1e-3, rtol=1e-3), float(jnp.max(jnp.abs(q2 - e2)))

    # Loose sanity check vs the full-f32 reference (bf16 operands => ~1e-2 tolerance).
    r1, r2 = _reference_forward_f32(x, u, t, params)
    assert jnp.allclose(q1, r1, atol=5e-2, rtol=5e-2)
    assert jnp.allclose(q2, r2, atol=5e-2, rtol=5e-2)

    # TODO(synk): use_match=True path (extra `match` feature in the concat) not exercised.
    print("KERNEL_OK")
</pallas_src>

<mosaic_0001>
module attributes {stable_mosaic.version = 11 : i64} {
  func.func @_critic2_fused_kernel(%arg0: memref<8x11xbf16, #tpu.memory_space<vmem>>, %arg1: memref<8x4xbf16, #tpu.memory_space<vmem>>, %arg2: memref<8x1xbf16, #tpu.memory_space<vmem>>, %arg3: memref<11x64xbf16, #tpu.memory_space<vmem>>, %arg4: memref<4x64xbf16, #tpu.memory_space<vmem>>, %arg5: memref<1x64xbf16, #tpu.memory_space<vmem>>, %arg6: memref<1x64xf32, #tpu.memory_space<vmem>>, %arg7: memref<64x64xbf16, #tpu.memory_space<vmem>>, %arg8: memref<1x64xf32, #tpu.memory_space<vmem>>, %arg9: memref<64x2xbf16, #tpu.memory_space<vmem>>, %arg10: memref<1x2xf32, #tpu.memory_space<vmem>>, %arg11: memref<8x2xf32, #tpu.memory_space<vmem>>) attributes {dimension_semantics = [], scalar_prefetch = 0 : i64, scratch_operands = 0 : i64, tpu.core_type = #tpu.core_type<tc>} {
    %c0 = arith.constant 0 : index
    %c0_0 = arith.constant 0 : index
    %0 = vector.load %arg0[%c0, %c0_0] : memref<8x11xbf16, #tpu.memory_space<vmem>>, vector<8x11xbf16>
    %c0_1 = arith.constant 0 : index
    %c0_2 = arith.constant 0 : index
    %1 = vector.load %arg3[%c0_1, %c0_2] : memref<11x64xbf16, #tpu.memory_space<vmem>>, vector<11x64xbf16>
    %cst = arith.constant dense<0.000000e+00> : vector<8x64xf32>
    %2 = tpu.matmul %0, %1, %cst {dimension_numbers = #tpu.dot_dimension_numbers<[1], [0], [0], [1], [0, 0, 1, 1], [], []>} : vector<8x11xbf16>, vector<11x64xbf16>, vector<8x64xf32> -> vector<8x64xf32>
    %c0_3 = arith.constant 0 : index
    %c0_4 = arith.constant 0 : index
    %3 = vector.load %arg1[%c0_3, %c0_4] : memref<8x4xbf16, #tpu.memory_space<vmem>>, vector<8x4xbf16>
    %c0_5 = arith.constant 0 : index
    %c0_6 = arith.constant 0 : index
    %4 = vector.load %arg4[%c0_5, %c0_6] : memref<4x64xbf16, #tpu.memory_space<vmem>>, vector<4x64xbf16>
    %cst_7 = arith.constant dense<0.000000e+00> : vector<8x64xf32>
    %5 = tpu.matmul %3, %4, %cst_7 {dimension_numbers = #tpu.dot_dimension_numbers<[1], [0], [0], [1], [0, 0, 1, 1], [], []>} : vector<8x4xbf16>, vector<4x64xbf16>, vector<8x64xf32> -> vector<8x64xf32>
    %6 = arith.addf %2, %5 : vector<8x64xf32>
    %c0_8 = arith.constant 0 : index
    %c0_9 = arith.constant 0 : index
    %7 = vector.load %arg2[%c0_8, %c0_9] : memref<8x1xbf16, #tpu.memory_space<vmem>>, vector<8x1xbf16>
    %8 = arith.extf %7 : vector<8x1xbf16> to vector<8x1xf32>
    %c0_10 = arith.constant 0 : index
    %c0_11 = arith.constant 0 : index
    %9 = vector.load %arg5[%c0_10, %c0_11] : memref<1x64xbf16, #tpu.memory_space<vmem>>, vector<1x64xbf16>
    %10 = arith.extf %9 : vector<1x64xbf16> to vector<1x64xf32>
    %11 = vector.broadcast %8 : vector<8x1xf32> to vector<8x64xf32>
    %12 = vector.broadcast %10 : vector<1x64xf32> to vector<8x64xf32>
    %13 = arith.mulf %11, %12 : vector<8x64xf32>
    %14 = arith.addf %6, %13 : vector<8x64xf32>
    %c0_12 = arith.constant 0 : index
    %c0_13 = arith.constant 0 : index
    %15 = vector.load %arg6[%c0_12, %c0_13] : memref<1x64xf32, #tpu.memory_space<vmem>>, vector<1x64xf32>
    %16 = vector.broadcast %15 : vector<1x64xf32> to vector<8x64xf32>
    %17 = arith.addf %14, %16 : vector<8x64xf32>
    %cst_14 = arith.constant 0.000000e+00 : f32
    %18 = vector.broadcast %cst_14 : f32 to vector<8x64xf32>
    %19 = arith.maximumf %17, %18 : vector<8x64xf32>
    %20 = arith.truncf %19 : vector<8x64xf32> to vector<8x64xbf16>
    %c0_15 = arith.constant 0 : index
    %c0_16 = arith.constant 0 : index
    %21 = vector.load %arg7[%c0_15, %c0_16] : memref<64x64xbf16, #tpu.memory_space<vmem>>, vector<64x64xbf16>
    %cst_17 = arith.constant dense<0.000000e+00> : vector<8x64xf32>
    %22 = tpu.matmul %20, %21, %cst_17 {dimension_numbers = #tpu.dot_dimension_numbers<[1], [0], [0], [1], [0, 0, 1, 1], [], []>} : vector<8x64xbf16>, vector<64x64xbf16>, vector<8x64xf32> -> vector<8x64xf32>
    %c0_18 = arith.constant 0 : index
    %c0_19 = arith.constant 0 : index
    %23 = vector.load %arg8[%c0_18, %c0_19] : memref<1x64xf32, #tpu.memory_space<vmem>>, vector<1x64xf32>
    %24 = vector.broadcast %23 : vector<1x64xf32> to vector<8x64xf32>
    %25 = arith.addf %22, %24 : vector<8x64xf32>
    %cst_20 = arith.constant 0.000000e+00 : f32
    %26 = vector.broadcast %cst_20 : f32 to vector<8x64xf32>
    %27 = arith.maximumf %25, %26 : vector<8x64xf32>
    %28 = arith.truncf %27 : vector<8x64xf32> to vector<8x64xbf16>
    %c0_21 = arith.constant 0 : index
    %c0_22 = arith.constant 0 : index
    %29 = vector.load %arg9[%c0_21, %c0_22] : memref<64x2xbf16, #tpu.memory_space<vmem>>, vector<64x2xbf16>
    %cst_23 = arith.constant dense<0.000000e+00> : vector<8x2xf32>
    %30 = tpu.matmul %28, %29, %cst_23 {dimension_numbers = #tpu.dot_dimension_numbers<[1], [0], [0], [1], [0, 0, 1, 1], [], []>} : vector<8x64xbf16>, vector<64x2xbf16>, vector<8x2xf32> -> vector<8x2xf32>
    %c0_24 = arith.constant 0 : index
    %c0_25 = arith.constant 0 : index
    %31 = vector.load %arg10[%c0_24, %c0_25] : memref<1x2xf32, #tpu.memory_space<vmem>>, vector<1x2xf32>
    %32 = vector.broadcast %31 : vector<1x2xf32> to vector<8x2xf32>
    %33 = arith.addf %30, %32 : vector<8x2xf32>
    %c0_26 = arith.constant 0 : index
    %c0_27 = arith.constant 0 : index
    %34 = vector.load %arg11[%c0_26, %c0_27] : memref<8x2xf32, #tpu.memory_space<vmem>>, vector<8x2xf32>
    tpu.vector_store %arg11[%c0_26, %c0_27], %33 {strides = array<i32>} : memref<8x2xf32, #tpu.memory_space<vmem>>, vector<8x2xf32>,
    return
  }
}

</mosaic_0001>

<llo_original>
// kernel: critic2_forward.1
$region0: #{critic2_forward.1}
  #allocation0 [shape = 'u32[]', space=smem, size = 0x4, offset = 0x4, fixed_abs, tag = 'smem constant byte address 0x4 - core index']
  #allocation1 [shape = 'u32[144,128]{1,0:T(1,128)}', space=vmem, size = 0x12000, scoped, tag = 'internal scratch']
  %s0 = inlined_call_operand.vmem [shape: bf16[8,11], index: 0, kind: input, shape index: {}]
  %s1 = inlined_call_operand.vmem [shape: bf16[8,4], index: 1, kind: input, shape index: {}]
  %s2 = inlined_call_operand.vmem [shape: bf16[8,1], index: 2, kind: input, shape index: {}]
  %s3 = inlined_call_operand.vmem [shape: bf16[11,64], index: 3, kind: input, shape index: {}]
  %s4 = inlined_call_operand.vmem [shape: bf16[4,64], index: 4, kind: input, shape index: {}]
  %s5 = inlined_call_operand.vmem [shape: bf16[1,64], index: 5, kind: input, shape index: {}]
  %s6 = inlined_call_operand.vmem [shape: f32[1,64], index: 6, kind: input, shape index: {}]
  %s7 = inlined_call_operand.vmem [shape: bf16[64,64], index: 7, kind: input, shape index: {}]
  %s8 = inlined_call_operand.vmem [shape: f32[1,64], index: 8, kind: input, shape index: {}]
  %s9 = inlined_call_operand.vmem [shape: bf16[64,2], index: 9, kind: input, shape index: {}]
  %s10 = inlined_call_operand.vmem [shape: f32[1,2], index: 10, kind: input, shape index: {}]
  %s11 = inlined_call_operand.vmem [shape: f32[8,2], index: 11, kind: output, shape index: {}]
  %s12 = sld [smem:[#allocation0]]
  $region54: #{critic2_forward.1} parent=0
    _
  %s14 = ssub.s32 1, %s12
  %s15 = scalar_select 0, %s14, %s12
  // Predicated region
  $region2: #{critic2_forward.1} parent=0 // pred_check
    _
  $region3: #{critic2_forward.1} parent=0 // pred_check_branch
    %17 = sbr.rel (0) target = $region5
  $region4: #{critic2_forward.1} parent=0 // pred_region
    _
  $region5: #{critic2_forward.1} parent=0 // pred_fallthru
    _
  // Predicated region
  $region6: #{critic2_forward.1} parent=0 // pred_check
    _
  $region7: #{critic2_forward.1} parent=0 // pred_check_branch
    %19 = sbr.rel (0) target = $region9
  $region8: #{critic2_forward.1} parent=0 // pred_region
    _
  $region9: #{critic2_forward.1} parent=0 // pred_fallthru
    _
  // Predicated region
  $region10: #{critic2_forward.1} parent=0 // pred_check
    _
  $region11: #{critic2_forward.1} parent=0 // pred_check_branch
    %21 = sbr.rel (0) target = $region13
  $region12: #{critic2_forward.1} parent=0 // pred_region
    _
  $region13: #{critic2_forward.1} parent=0 // pred_fallthru
    _
  // Predicated region
  $region14: #{critic2_forward.1} parent=0 // pred_check
    _
  $region15: #{critic2_forward.1} parent=0 // pred_check_branch
    %23 = sbr.rel (0) target = $region17
  $region16: #{critic2_forward.1} parent=0 // pred_region
    _
  $region17: #{critic2_forward.1} parent=0 // pred_fallthru
    _
  // Predicated region
  $region18: #{critic2_forward.1} parent=0 // pred_check
    _
  $region19: #{critic2_forward.1} parent=0 // pred_check_branch
    %25 = sbr.rel (0) target = $region21
  $region20: #{critic2_forward.1} parent=0 // pred_region
    _
  $region21: #{critic2_forward.1} parent=0 // pred_fallthru
    _
  // Predicated region
  $region22: #{critic2_forward.1} parent=0 // pred_check
    _
  $region23: #{critic2_forward.1} parent=0 // pred_check_branch
    %27 = sbr.rel (0) target = $region25
  $region24: #{critic2_forward.1} parent=0 // pred_region
    _
  $region25: #{critic2_forward.1} parent=0 // pred_fallthru
    _
  // Predicated region
  $region26: #{critic2_forward.1} parent=0 // pred_check
    _
  $region27: #{critic2_forward.1} parent=0 // pred_check_branch
    %29 = sbr.rel (0) target = $region29
  $region28: #{critic2_forward.1} parent=0 // pred_region
    _
  $region29: #{critic2_forward.1} parent=0 // pred_fallthru
    _
  // Predicated region
  $region30: #{critic2_forward.1} parent=0 // pred_check
    _
  $region31: #{critic2_forward.1} parent=0 // pred_check_branch
    %31 = sbr.rel (0) target = $region33
  $region32: #{critic2_forward.1} parent=0 // pred_region
    _
  $region33: #{critic2_forward.1} parent=0 // pred_fallthru
    _
  // Predicated region
  $region34: #{critic2_forward.1} parent=0 // pred_check
    _
  $region35: #{critic2_forward.1} parent=0 // pred_check_branch
    %33 = sbr.rel (0) target = $region37
  $region36: #{critic2_forward.1} parent=0 // pred_region
    _
  $region37: #{critic2_forward.1} parent=0 // pred_fallthru
    _
  // Predicated region
  $region38: #{critic2_forward.1} parent=0 // pred_check
    _
  $region39: #{critic2_forward.1} parent=0 // pred_check_branch
    %35 = sbr.rel (0) target = $region41
  $region40: #{critic2_forward.1} parent=0 // pred_region
    _
  $region41: #{critic2_forward.1} parent=0 // pred_fallthru
    _
  // Predicated region
  $region42: #{critic2_forward.1} parent=0 // pred_check
    _
  $region43: #{critic2_forward.1} parent=0 // pred_check_branch
    %37 = sbr.rel (0) target = $region45
  $region44: #{critic2_forward.1} parent=0 // pred_region
    _
  $region45: #{critic2_forward.1} parent=0 // pred_fallthru
    _
  %v39 = vld [vmem:[%s0] sm:$0xf]
  %v40 = vld [vmem:[%s3] sm:$0xf]
  %v41 = vld [vmem:[%s3 + $0x4] sm:$0x3]
  %v42 = vld [vmem:[%s1] sm:$0xf]
  %v43 = vld [vmem:[%s4] sm:$0x3]
  %vm44 = vcmask 31744
  %v46 = vsel %vm44, %v42, 0
  %vm48 = vcmask 1041408
  %v50 = vsel %vm48, %v43, 0
  %52 = vmatprep.subr.bf16.mxu0 0
  %53 = vmatpush1.bf16.msra.mxu0 %v50
  %54 = vmatprep.subr.bf16.mxu0 0
  %55 = vmatpush1.bf16.msra.mxu0 0
  %56 = vmatprep.subr.bf16.mxu0 0
  %57 = vmatpush1.bf16.msra.mxu0 0
  %58 = vmatprep.subr.bf16.mxu0 0
  %59 = vmatpush1.bf16.msra.mxu0 0
  %60 = vmatprep.subr.bf16.mxu0 0
  %61 = vmatpush1.bf16.msra.mxu0 0
  %62 = vmatprep.subr.bf16.mxu0 0
  %63 = vmatpush1.bf16.msra.mxu0 0
  %64 = vmatprep.subr.bf16.mxu0 0
  %65 = vmatpush1.bf16.msra.mxu0 0
  %66 = vmatprep.subr.bf16.mxu0 0
  %67 = vmatpush1.bf16.msra.mxu0 0
  %68 = vmatprep.subr.bf16.mxu0 0
  %69 = vmatpush1.bf16.msra.mxu0 0
  %70 = vmatprep.subr.bf16.mxu0 0
  %71 = vmatpush1.bf16.msra.mxu0 0
  %72 = vmatprep.subr.bf16.mxu0 0
  %73 = vmatpush1.bf16.msra.mxu0 0
  %74 = vmatprep.subr.bf16.mxu0 0
  %75 = vmatpush1.bf16.msra.mxu0 0
  %76 = vmatprep.subr.bf16.mxu0 0
  %77 = vmatpush1.bf16.msra.mxu0 0
  %78 = vmatprep.subr.bf16.mxu0 0
  %79 = vmatpush1.bf16.msra.mxu0 0
  %80 = vmatprep.subr.bf16.mxu0 0
  %81 = vmatpush1.bf16.msra.mxu0 0
  %82 = vmatprep.subr.bf16.mxu0 0
  %83 = vmatpush1.bf16.msra.mxu0 0
  %84 = vmatprep.mubr.bf16.mxu0 0
  %85 = vmatmul.mubr.bf16.gmra.mrb[0].mxu0 %v46
  %v86 = vpop.f32.mrb[0].mxu0
  %v87 = vadd.f32 0.0, %v86
  %v88 = vpop.f32.mrb[0].mxu0
  %v89 = vpop.f32.mrb[0].mxu0
  %v90 = vpop.f32.mrb[0].mxu0
  %91 = vdwg.mxu0
  %v94 = vunpack.c.l.b16 %v40
  %v95 = vunpack.c.l.b16 %v41
  %v96 = vpack.c.b16 %v95, %v94
  %vm97 = vcmask 89088
  %v99 = vsel %vm97, %v39, 0
  %vm101 = vcmask 1044480
  %vm102 = vcmask 1045504
  %v103 = vsel %vm101, 4294967295, 65535
  %v104 = vsel %vm102, %v103, 0
  %v106 = vand.u32 %v96, %v104
  %108 = vmatprep.subr.bf16.mxu0 0
  %109 = vmatpush1.bf16.msra.mxu0 %v106
  %110 = vmatprep.subr.bf16.mxu0 0
  %111 = vmatpush1.bf16.msra.mxu0 0
  %112 = vmatprep.subr.bf16.mxu0 0
  %113 = vmatpush1.bf16.msra.mxu0 0
  %114 = vmatprep.subr.bf16.mxu0 0
  %115 = vmatpush1.bf16.msra.mxu0 0
  %116 = vmatprep.subr.bf16.mxu0 0
  %117 = vmatpush1.bf16.msra.mxu0 0
  %118 = vmatprep.subr.bf16.mxu0 0
  %119 = vmatpush1.bf16.msra.mxu0 0
  %120 = vmatprep.subr.bf16.mxu0 0
  %121 = vmatpush1.bf16.msra.mxu0 0
  %122 = vmatprep.subr.bf16.mxu0 0
  %123 = vmatpush1.bf16.msra.mxu0 0
  %124 = vmatprep.subr.bf16.mxu0 0
  %125 = vmatpush1.bf16.msra.mxu0 0
  %126 = vmatprep.subr.bf16.mxu0 0
  %127 = vmatpush1.bf16.msra.mxu0 0
  %128 = vmatprep.subr.bf16.mxu0 0
  %129 = vmatpush1.bf16.msra.mxu0 0
  %130 = vmatprep.subr.bf16.mxu0 0
  %131 = vmatpush1.bf16.msra.mxu0 0
  %132 = vmatprep.subr.bf16.mxu0 0
  %133 = vmatpush1.bf16.msra.mxu0 0
  %134 = vmatprep.subr.bf16.mxu0 0
  %135 = vmatpush1.bf16.msra.mxu0 0
  %136 = vmatprep.subr.bf16.mxu0 0
  %137 = vmatpush1.bf16.msra.mxu0 0
  %138 = vmatprep.subr.bf16.mxu0 0
  %139 = vmatpush1.bf16.msra.mxu0 0
  %140 = vmatprep.mubr.bf16.mxu0 0
  %141 = vmatmul.mubr.bf16.gmra.mrb[0].mxu0 %v99
  %v142 = vpop.f32.mrb[0].mxu0
  %v143 = vadd.f32 %v87, %v142
  %v144 = vpop.f32.mrb[0].mxu0
  %v145 = vpop.f32.mrb[0].mxu0
  %v146 = vpop.f32.mrb[0].mxu0
  %147 = vdwg.mxu0
  %v148 = vld [vmem:[%s2] sm:$0xf]
  %v149 = vunpack.c.l.bf16 %v148
  %v150 = vld [vmem:[%s5] sm:$0x1]
  %v151 = vunpack.c.l.bf16 %v150
  %153 = vset.pattern.permute.xlu0 0
  %154 = vperm.xlu0 %153, %v149
  %v155 = vpop.permute.xlu0 %154
  %v157 = vlaneseq
  %v158 = vshrl.u32 %v157, 7
  %v159 = vsub.s32 0, %v158
  %v160 = vrot.slane %v151, %v159
  %v161 = vmul.f32 %v155, %v160
  %v162 = vadd.f32 %v143, %v161
  %v163 = vld [vmem:[%s6] sm:$0x1]
  %v165 = vlaneseq
  %v166 = vshrl.u32 %v165, 7
  %v167 = vsub.s32 0, %v166
  %v168 = vrot.slane %v163, %v167
  %v170 = vadd.f32 %v162, %v168
  %v171 = vmax.f32 %v170, 0.0
  %v172 = vpack.c.bf16 %v171, %v171
  %v173 = vld [vmem:[%s7] sm:$0xf]
  %v174 = vld [vmem:[%s7 + $0x4] sm:$0xf]
  %v175 = vld [vmem:[%s7 + $0x8] sm:$0xf]
  %v176 = vld [vmem:[%s7 + $0xc] sm:$0xf]
  %v177 = vld [vmem:[%s7 + $0x10] sm:$0xf]
  %v178 = vld [vmem:[%s7 + $0x14] sm:$0xf]
  %v179 = vld [vmem:[%s7 + $0x18] sm:$0xf]
  %v180 = vld [vmem:[%s7 + $0x1c] sm:$0xf]
  %v181 = vld [vmem:[%s8] sm:$0x1]
  %v183 = vlaneseq
  %v184 = vshrl.u32 %v183, 7
  %v185 = vsub.s32 0, %v184
  %v186 = vrot.slane %v181, %v185
  %v196 = vunpack.c.l.b16 %v173
  %v197 = vunpack.c.l.b16 %v174
  %v198 = vunpack.c.l.b16 %v175
  %v199 = vunpack.c.l.b16 %v176
  %v200 = vunpack.c.l.b16 %v177
  %v201 = vunpack.c.l.b16 %v178
  %v202 = vunpack.c.l.b16 %v179
  %v203 = vunpack.c.l.b16 %v180
  %v204 = vpack.c.b16 %v197, %v196
  %v205 = vpack.c.b16 %v199, %v198
  %v206 = vpack.c.b16 %v201, %v200
  %v207 = vpack.c.b16 %v203, %v202
  %vm212 = vcmask 523264
  %v214 = vsel %vm212, %v172, 0
  %216 = vmatprep.subr.bf16.mxu0 0
  %217 = vmatpush1.bf16.msra.mxu0 %v204
  %218 = vmatprep.subr.bf16.mxu0 0
  %219 = vmatpush1.bf16.msra.mxu0 %v205
  %220 = vmatprep.subr.bf16.mxu0 0
  %221 = vmatpush1.bf16.msra.mxu0 %v206
  %222 = vmatprep.subr.bf16.mxu0 0
  %223 = vmatpush1.bf16.msra.mxu0 %v207
  %224 = vmatprep.subr.bf16.mxu0 0
  %225 = vmatpush1.bf16.msra.mxu0 0
  %226 = vmatprep.subr.bf16.mxu0 0
  %227 = vmatpush1.bf16.msra.mxu0 0
  %228 = vmatprep.subr.bf16.mxu0 0
  %229 = vmatpush1.bf16.msra.mxu0 0
  %230 = vmatprep.subr.bf16.mxu0 0
  %231 = vmatpush1.bf16.msra.mxu0 0
  %232 = vmatprep.subr.bf16.mxu0 0
  %233 = vmatpush1.bf16.msra.mxu0 0
  %234 = vmatprep.subr.bf16.mxu0 0
  %235 = vmatpush1.bf16.msra.mxu0 0
  %236 = vmatprep.subr.bf16.mxu0 0
  %237 = vmatpush1.bf16.msra.mxu0 0
  %238 = vmatprep.subr.bf16.mxu0 0
  %239 = vmatpush1.bf16.msra.mxu0 0
  %240 = vmatprep.subr.bf16.mxu0 0
  %241 = vmatpush1.bf16.msra.mxu0 0
  %242 = vmatprep.subr.bf16.mxu0 0
  %243 = vmatpush1.bf16.msra.mxu0 0
  %244 = vmatprep.subr.bf16.mxu0 0
  %245 = vmatpush1.bf16.msra.mxu0 0
  %246 = vmatprep.subr.bf16.mxu0 0
  %247 = vmatpush1.bf16.msra.mxu0 0
  %248 = vmatprep.mubr.bf16.mxu0 0
  %249 = vmatmul.mubr.bf16.gmra.mrb[0].mxu0 %v214
  %v250 = vpop.f32.mrb[0].mxu0
  %v251 = vadd.f32 %v186, %v250
  %v252 = vpop.f32.mrb[0].mxu0
  %v253 = vpop.f32.mrb[0].mxu0
  %v254 = vpop.f32.mrb[0].mxu0
  %255 = vdwg.mxu0
  %v256 = vmax.f32 %v251, 0.0
  %v257 = vpack.c.bf16 %v256, %v256
  %v258 = vld [vmem:[%s9] sm:$0xf]
  %v259 = vld [vmem:[%s9 + $0x4] sm:$0xf]
  %v260 = vld [vmem:[%s9 + $0x8] sm:$0xf]
  %v261 = vld [vmem:[%s9 + $0xc] sm:$0xf]
  %v262 = vld [vmem:[%s9 + $0x10] sm:$0xf]
  %v263 = vld [vmem:[%s9 + $0x14] sm:$0xf]
  %v264 = vld [vmem:[%s9 + $0x18] sm:$0xf]
  %v265 = vld [vmem:[%s9 + $0x1c] sm:$0xf]
  %v266 = vld [vmem:[%s10] sm:$0x1]
  %v268 = vlaneseq
  %v269 = vshrl.u32 %v268, 7
  %v270 = vsub.s32 0, %v269
  %v271 = vrot.slane %v266, %v270
  %v281 = vunpack.c.l.b16 %v258
  %v282 = vunpack.c.l.b16 %v259
  %v283 = vunpack.c.l.b16 %v260
  %v284 = vunpack.c.l.b16 %v261
  %v285 = vunpack.c.l.b16 %v262
  %v286 = vunpack.c.l.b16 %v263
  %v287 = vunpack.c.l.b16 %v264
  %v288 = vunpack.c.l.b16 %v265
  %v289 = vpack.c.b16 %v282, %v281
  %v290 = vpack.c.b16 %v284, %v283
  %v291 = vpack.c.b16 %v286, %v285
  %v292 = vpack.c.b16 %v288, %v287
  %v298 = vsel %vm212, %v257, 0
  %300 = vmatprep.subr.bf16.mxu0 0
  %301 = vmatpush1.bf16.msra.mxu0 %v289
  %302 = vmatprep.subr.bf16.mxu0 0
  %303 = vmatpush1.bf16.msra.mxu0 %v290
  %304 = vmatprep.subr.bf16.mxu0 0
  %305 = vmatpush1.bf16.msra.mxu0 %v291
  %306 = vmatprep.subr.bf16.mxu0 0
  %307 = vmatpush1.bf16.msra.mxu0 %v292
  %308 = vmatprep.subr.bf16.mxu0 0
  %309 = vmatpush1.bf16.msra.mxu0 0
  %310 = vmatprep.subr.bf16.mxu0 0
  %311 = vmatpush1.bf16.msra.mxu0 0
  %312 = vmatprep.subr.bf16.mxu0 0
  %313 = vmatpush1.bf16.msra.mxu0 0
  %314 = vmatprep.subr.bf16.mxu0 0
  %315 = vmatpush1.bf16.msra.mxu0 0
  %316 = vmatprep.subr.bf16.mxu0 0
  %317 = vmatpush1.bf16.msra.mxu0 0
  %318 = vmatprep.subr.bf16.mxu0 0
  %319 = vmatpush1.bf16.msra.mxu0 0
  %320 = vmatprep.subr.bf16.mxu0 0
  %321 = vmatpush1.bf16.msra.mxu0 0
  %322 = vmatprep.subr.bf16.mxu0 0
  %323 = vmatpush1.bf16.msra.mxu0 0
  %324 = vmatprep.subr.bf16.mxu0 0
  %325 = vmatpush1.bf16.msra.mxu0 0
  %326 = vmatprep.subr.bf16.mxu0 0
  %327 = vmatpush1.bf16.msra.mxu0 0
  %328 = vmatprep.subr.bf16.mxu0 0
  %329 = vmatpush1.bf16.msra.mxu0 0
  %330 = vmatprep.subr.bf16.mxu0 0
  %331 = vmatpush1.bf16.msra.mxu0 0
  %332 = vmatprep.mubr.bf16.mxu0 0
  %333 = vmatmul.mubr.bf16.gmra.mrb[0].mxu0 %v298
  %v334 = vpop.f32.mrb[0].mxu0
  %v335 = vadd.f32 %v271, %v334
  %v336 = vpop.f32.mrb[0].mxu0
  %v337 = vpop.f32.mrb[0].mxu0
  %v338 = vpop.f32.mrb[0].mxu0
  %339 = vdwg.mxu0
  %vm340 = vcmask 15360
  %341 = vst.msk [vmem:[%s11] sm:$0xff] %vm340, %v335
  // Predicated region
  $region46: #{critic2_forward.1} parent=0 // pred_check
    _
  $region47: #{critic2_forward.1} parent=0 // pred_check_branch
    %343 = sbr.rel (0) target = $region49
  $region48: #{critic2_forward.1} parent=0 // pred_region
    _
  $region49: #{critic2_forward.1} parent=0 // pred_fallthru
    _
  // Predicated region
  $region50: #{critic2_forward.1} parent=0 // pred_check
    _
  $region51: #{critic2_forward.1} parent=0 // pred_check_branch
    %345 = sbr.rel (0) target = $region53
  $region52: #{critic2_forward.1} parent=0 // pred_region
    _
  $region53: #{critic2_forward.1} parent=0 // pred_fallthru
    _

</llo_original>
